<compile_context>
chip_gen: v7x
topology: tpu7x:2x2x1
jax: 0.10.0
libtpu: 0.0.40
codegen_flags: <defaults>
</compile_context>

<pallas_src>
import math

import jax
import jax.numpy as jnp
import numpy as np
from jax.experimental import pallas as pl
from jax.experimental.pallas import tpu as pltpu  # noqa: F401  (TPU backend)

# ----------------------------- config -----------------------------
B = 2         # batch
T = 8         # sequence length
D = 32        # h_size
HOUT = 128    # h_out (lane-dense output width)
L = 2         # num_layers
N = B * T     # flattened rows (sublane axis)

INV_SQRT2 = 0.7071067811865476
SQRT_2_OVER_PI = 0.7978845608028654

# ------------------ packed parameter buffer layout ------------------
PROJ_W = 256                      # lane width of fused [linear | gate] projection
GATE_OFF = 128                    # gate columns start on a 128-lane tile boundary
HW_W_ROWS = L * D                 # rows 0 .. 63 : per-layer fused weights
HW_B_ROW0 = HW_W_ROWS             # bias for layer i at row HW_B_ROW0 + 8*i (8-aligned)
FC_W_ROW0 = HW_B_ROW0 + 8 * L     # rows 80 .. 111 : fc weight (lanes 0:HOUT)
FC_B_ROW = FC_W_ROW0 + D          # row 112        : fc bias   (lanes 0:HOUT)
PARAM_ROWS = ((FC_B_ROW + 1 + 7) // 8) * 8   # 120 (pad to sublane multiple)


# ----------------------------- kernel helpers -----------------------------
def _gelu_tanh(x):
    # tanh-form gelu (GPT variant); single EUP tanh on the critical chain.
    return 0.5 * x * (1.0 + jnp.tanh(SQRT_2_OVER_PI * (x + 0.044715 * x * x * x)))


def _sigmoid(x):
    # exact identity sigmoid(x) = 0.5*(1 + tanh(x/2)); single EUP tanh.
    return 0.5 * (1.0 + jnp.tanh(0.5 * x))


# ----------------------------- kernel -----------------------------
def highway_kernel(x_ref, p_ref, o_ref):
    # x_ref: (N, D)             flattened (batch*seq) rows, f32
    # p_ref: (PARAM_ROWS, 256)  packed parameters (see layout above)
    # o_ref: (N, HOUT)
    x = x_ref[...]                                                    # (N, D)
    for i in range(L):                                                # unrolled, L=2
        w = p_ref[i * D:(i + 1) * D, :]                               # (D, 256)
        b = p_ref[HW_B_ROW0 + 8 * i: HW_B_ROW0 + 8 * i + 1, :]        # (1, 256)
        y = jnp.dot(x, w, preferred_element_type=jnp.float32) + b     # (N, 256)
        h = _gelu_tanh(y[:, :D])                  # lanes   0:D   (tile-aligned)
        t = _sigmoid(y[:, GATE_OFF:GATE_OFF + D])  # lanes 128:128+D (tile-aligned)
        x = x + t * (h - x)                        # highway update (3 VALU ops)
    w_fc = p_ref[FC_W_ROW0:FC_W_ROW0 + D, :HOUT]                      # (D, HOUT)
    b_fc = p_ref[FC_B_ROW:FC_B_ROW + 1, :HOUT]                        # (1, HOUT)
    out = jnp.dot(x, w_fc, preferred_element_type=jnp.float32) + b_fc  # (N, HOUT)
    o_ref[...] = out.astype(o_ref.dtype)


def highway(x, params):
    # Single kernel invocation, no grid: batch+seq flattened onto the sublane
    # axis, everything resident in VMEM (~130 KB << VMEM on all generations).
    x2d = x.reshape(N, D)
    out = pl.pallas_call(
        highway_kernel,
        out_shape=jax.ShapeDtypeStruct((N, HOUT), jnp.float32),
    )(x2d, params)
    return out.reshape(B, T, HOUT)


# ----------------------------- parameter packing -----------------------------
def pack_params(w_lin, b_lin, w_gate, b_gate, w_fc, b_fc):
    p = jnp.zeros((PARAM_ROWS, PROJ_W), jnp.float32)
    for i in range(L):
        p = p.at[i * D:(i + 1) * D, :D].set(w_lin[i])
        p = p.at[i * D:(i + 1) * D, GATE_OFF:GATE_OFF + D].set(w_gate[i])
        p = p.at[HW_B_ROW0 + 8 * i, :D].set(b_lin[i])
        p = p.at[HW_B_ROW0 + 8 * i, GATE_OFF:GATE_OFF + D].set(b_gate[i])
    p = p.at[FC_W_ROW0:FC_W_ROW0 + D, :HOUT].set(w_fc)
    p = p.at[FC_B_ROW, :HOUT].set(b_fc[0])
    return p


# ----------------------------- reference (pure JAX, exact erf/sigmoid) -----------------------------
def reference(x, w_lin, b_lin, w_gate, b_gate, w_fc, b_fc):
    for i in range(L):
        h = x @ w_lin[i] + b_lin[i]
        h = h * 0.5 * (1.0 + jax.lax.erf(h * INV_SQRT2))
        t = jax.nn.sigmoid(x @ w_gate[i] + b_gate[i])
        x = t * h + (1.0 - t) * x
    return x @ w_fc + b_fc


# ----------------------------- main -----------------------------
if __name__ == "__main__":
    key = jax.random.PRNGKey(0)
    keys = jax.random.split(key, 8)

    x = jax.random.normal(keys[0], (B, T, D), dtype=jnp.float32)

    sc = 1.0 / math.sqrt(D)
    w_lin = jax.random.normal(keys[1], (L, D, D), dtype=jnp.float32) * sc
    b_lin = jax.random.normal(keys[2], (L, D), dtype=jnp.float32) * 0.01
    w_gate = jax.random.normal(keys[3], (L, D, D), dtype=jnp.float32) * sc
    b_gate = jax.random.normal(keys[4], (L, D), dtype=jnp.float32) * 0.01
    w_fc = jax.random.normal(keys[5], (D, HOUT), dtype=jnp.float32) * sc
    b_fc = jax.random.normal(keys[6], (1, HOUT), dtype=jnp.float32) * 0.01

    params = pack_params(w_lin, b_lin, w_gate, b_gate, w_fc, b_fc)

    out = highway(x, params)
    out = jax.block_until_ready(out)

    ref = reference(x, w_lin, b_lin, w_gate, b_gate, w_fc, b_fc)
    np.testing.assert_allclose(np.asarray(out), np.asarray(ref), rtol=1e-2, atol=1e-2)

    print("KERNEL_OK")
</pallas_src>

<mosaic_0001>
module attributes {stable_mosaic.version = 11 : i64} {
  func.func @highway_kernel(%arg0: memref<16x32xf32, #tpu.memory_space<vmem>>, %arg1: memref<120x256xf32, #tpu.memory_space<vmem>>, %arg2: memref<16x128xf32, #tpu.memory_space<vmem>>) attributes {dimension_semantics = [], scalar_prefetch = 0 : i64, scratch_operands = 0 : i64, tpu.core_type = #tpu.core_type<tc>} {
    %c0 = arith.constant 0 : index
    %c0_0 = arith.constant 0 : index
    %0 = vector.load %arg0[%c0, %c0_0] : memref<16x32xf32, #tpu.memory_space<vmem>>, vector<16x32xf32>
    %c0_1 = arith.constant 0 : index
    %c0_2 = arith.constant 0 : index
    %1 = vector.load %arg1[%c0_1, %c0_2] : memref<120x256xf32, #tpu.memory_space<vmem>>, vector<32x256xf32>
    %c64 = arith.constant 64 : index
    %c0_3 = arith.constant 0 : index
    %2 = vector.load %arg1[%c64, %c0_3] : memref<120x256xf32, #tpu.memory_space<vmem>>, vector<1x256xf32>
    %cst = arith.constant dense<0.000000e+00> : vector<16x256xf32>
    %3 = tpu.matmul %0, %1, %cst {dimension_numbers = #tpu.dot_dimension_numbers<[1], [0], [0], [1], [0, 0, 1, 1], [], []>} : vector<16x32xf32>, vector<32x256xf32>, vector<16x256xf32> -> vector<16x256xf32>
    %4 = vector.broadcast %2 : vector<1x256xf32> to vector<16x256xf32>
    %5 = arith.addf %3, %4 : vector<16x256xf32>
    %6 = vector.extract_strided_slice %5 {offsets = [0, 0], sizes = [16, 32], strides = [1, 1]} : vector<16x256xf32> to vector<16x32xf32>
    %cst_4 = arith.constant 5.000000e-01 : f32
    %7 = vector.broadcast %cst_4 : f32 to vector<16x32xf32>
    %8 = arith.mulf %7, %6 : vector<16x32xf32>
    %cst_5 = arith.constant 4.471500e-02 : f32
    %9 = vector.broadcast %cst_5 : f32 to vector<16x32xf32>
    %10 = arith.mulf %9, %6 : vector<16x32xf32>
    %11 = arith.mulf %10, %6 : vector<16x32xf32>
    %12 = arith.mulf %11, %6 : vector<16x32xf32>
    %13 = arith.addf %6, %12 : vector<16x32xf32>
    %cst_6 = arith.constant 0.797884583 : f32
    %14 = vector.broadcast %cst_6 : f32 to vector<16x32xf32>
    %15 = arith.mulf %14, %13 : vector<16x32xf32>
    %16 = math.tanh %15 : vector<16x32xf32>
    %cst_7 = arith.constant 1.000000e+00 : f32
    %17 = vector.broadcast %cst_7 : f32 to vector<16x32xf32>
    %18 = arith.addf %17, %16 : vector<16x32xf32>
    %19 = arith.mulf %8, %18 : vector<16x32xf32>
    %20 = vector.extract_strided_slice %5 {offsets = [0, 128], sizes = [16, 32], strides = [1, 1]} : vector<16x256xf32> to vector<16x32xf32>
    %cst_8 = arith.constant 5.000000e-01 : f32
    %21 = vector.broadcast %cst_8 : f32 to vector<16x32xf32>
    %22 = arith.mulf %21, %20 : vector<16x32xf32>
    %23 = math.tanh %22 : vector<16x32xf32>
    %cst_9 = arith.constant 1.000000e+00 : f32
    %24 = vector.broadcast %cst_9 : f32 to vector<16x32xf32>
    %25 = arith.addf %24, %23 : vector<16x32xf32>
    %cst_10 = arith.constant 5.000000e-01 : f32
    %26 = vector.broadcast %cst_10 : f32 to vector<16x32xf32>
    %27 = arith.mulf %26, %25 : vector<16x32xf32>
    %28 = arith.subf %19, %0 : vector<16x32xf32>
    %29 = arith.mulf %27, %28 : vector<16x32xf32>
    %30 = arith.addf %0, %29 : vector<16x32xf32>
    %c32 = arith.constant 32 : index
    %c0_11 = arith.constant 0 : index
    %31 = vector.load %arg1[%c32, %c0_11] : memref<120x256xf32, #tpu.memory_space<vmem>>, vector<32x256xf32>
    %c72 = arith.constant 72 : index
    %c0_12 = arith.constant 0 : index
    %32 = vector.load %arg1[%c72, %c0_12] : memref<120x256xf32, #tpu.memory_space<vmem>>, vector<1x256xf32>
    %cst_13 = arith.constant dense<0.000000e+00> : vector<16x256xf32>
    %33 = tpu.matmul %30, %31, %cst_13 {dimension_numbers = #tpu.dot_dimension_numbers<[1], [0], [0], [1], [0, 0, 1, 1], [], []>} : vector<16x32xf32>, vector<32x256xf32>, vector<16x256xf32> -> vector<16x256xf32>
    %34 = vector.broadcast %32 : vector<1x256xf32> to vector<16x256xf32>
    %35 = arith.addf %33, %34 : vector<16x256xf32>
    %36 = vector.extract_strided_slice %35 {offsets = [0, 0], sizes = [16, 32], strides = [1, 1]} : vector<16x256xf32> to vector<16x32xf32>
    %cst_14 = arith.constant 5.000000e-01 : f32
    %37 = vector.broadcast %cst_14 : f32 to vector<16x32xf32>
    %38 = arith.mulf %37, %36 : vector<16x32xf32>
    %cst_15 = arith.constant 4.471500e-02 : f32
    %39 = vector.broadcast %cst_15 : f32 to vector<16x32xf32>
    %40 = arith.mulf %39, %36 : vector<16x32xf32>
    %41 = arith.mulf %40, %36 : vector<16x32xf32>
    %42 = arith.mulf %41, %36 : vector<16x32xf32>
    %43 = arith.addf %36, %42 : vector<16x32xf32>
    %cst_16 = arith.constant 0.797884583 : f32
    %44 = vector.broadcast %cst_16 : f32 to vector<16x32xf32>
    %45 = arith.mulf %44, %43 : vector<16x32xf32>
    %46 = math.tanh %45 : vector<16x32xf32>
    %cst_17 = arith.constant 1.000000e+00 : f32
    %47 = vector.broadcast %cst_17 : f32 to vector<16x32xf32>
    %48 = arith.addf %47, %46 : vector<16x32xf32>
    %49 = arith.mulf %38, %48 : vector<16x32xf32>
    %50 = vector.extract_strided_slice %35 {offsets = [0, 128], sizes = [16, 32], strides = [1, 1]} : vector<16x256xf32> to vector<16x32xf32>
    %cst_18 = arith.constant 5.000000e-01 : f32
    %51 = vector.broadcast %cst_18 : f32 to vector<16x32xf32>
    %52 = arith.mulf %51, %50 : vector<16x32xf32>
    %53 = math.tanh %52 : vector<16x32xf32>
    %cst_19 = arith.constant 1.000000e+00 : f32
    %54 = vector.broadcast %cst_19 : f32 to vector<16x32xf32>
    %55 = arith.addf %54, %53 : vector<16x32xf32>
    %cst_20 = arith.constant 5.000000e-01 : f32
    %56 = vector.broadcast %cst_20 : f32 to vector<16x32xf32>
    %57 = arith.mulf %56, %55 : vector<16x32xf32>
    %58 = arith.subf %49, %30 : vector<16x32xf32>
    %59 = arith.mulf %57, %58 : vector<16x32xf32>
    %60 = arith.addf %30, %59 : vector<16x32xf32>
    %c80 = arith.constant 80 : index
    %c0_21 = arith.constant 0 : index
    %61 = vector.load %arg1[%c80, %c0_21] : memref<120x256xf32, #tpu.memory_space<vmem>>, vector<32x128xf32>
    %c112 = arith.constant 112 : index
    %c0_22 = arith.constant 0 : index
    %62 = vector.load %arg1[%c112, %c0_22] : memref<120x256xf32, #tpu.memory_space<vmem>>, vector<1x128xf32>
    %cst_23 = arith.constant dense<0.000000e+00> : vector<16x128xf32>
    %63 = tpu.matmul %60, %61, %cst_23 {dimension_numbers = #tpu.dot_dimension_numbers<[1], [0], [0], [1], [0, 0, 1, 1], [], []>} : vector<16x32xf32>, vector<32x128xf32>, vector<16x128xf32> -> vector<16x128xf32>
    %64 = vector.broadcast %62 : vector<1x128xf32> to vector<16x128xf32>
    %65 = arith.addf %63, %64 : vector<16x128xf32>
    %c0_24 = arith.constant 0 : index
    %c0_25 = arith.constant 0 : index
    %66 = vector.load %arg2[%c0_24, %c0_25] : memref<16x128xf32, #tpu.memory_space<vmem>>, vector<16x128xf32>
    tpu.vector_store %arg2[%c0_24, %c0_25], %65 {strides = array<i32>} : memref<16x128xf32, #tpu.memory_space<vmem>>, vector<16x128xf32>,
    return
  }
}

</mosaic_0001>

<llo_original>
// kernel: tpu_custom_call.1
$region0: #{tpu_custom_call.1}
  #allocation0 [shape = 'u32[]', space=smem, size = 0x4, offset = 0x4, fixed_abs, tag = 'smem constant byte address 0x4 - core index']
  #allocation1 [shape = 'u32[144,128]{1,0:T(1,128)}', space=vmem, size = 0x12000, scoped, tag = 'internal scratch']
  %s0 = inlined_call_operand.hbm [shape: f32[16,32], index: 0, kind: input, shape index: {}]
  %s1 = inlined_call_operand.hbm [shape: f32[120,256], index: 1, kind: input, shape index: {}]
  %s2 = inlined_call_operand.hbm [shape: f32[16,128], index: 2, kind: output, shape index: {}]
  %s3 = sld [smem:[#allocation0]]
  $region26: #{tpu_custom_call.1} parent=0
    _
  %s5 = ssub.s32 1, %s3
  %s6 = scalar_select 0, %s5, %s3
  $region1: #{tpu_custom_call.1} parent=0
    #allocation2 [shape = 'u8[8192]{0}', space=vmem, size = 0x2000, scoped, tag = 'input window, operand 0, single buffered']
    #allocation3 [shape = 's32[1]{0}', space=sflag, size = 0x4, scoped, tag = 'scoped memory for tpu_custom_call.1']
    #allocation4 [shape = 's32[1]{0}', space=sflag, size = 0x4, scoped, tag = 'scoped memory for tpu_custom_call.1']
    #allocation5 [shape = 'u8[122880]{0}', space=vmem, size = 0x1e000, scoped, tag = 'input window, operand 1, single buffered']
    #allocation6 [shape = 's32[1]{0}', space=sflag, size = 0x4, scoped, tag = 'scoped memory for tpu_custom_call.1']
    #allocation7 [shape = 'u8[8192]{0}', space=vmem, size = 0x2000, scoped, tag = 'output window, operand 0, single buffered']
    %7 = vsyncpa [#allocation3], 0
    %8 = vsyncpa [#allocation6], 0
    %9 = vsyncpa [#allocation4], 0
    // Predicated region
    $region2: #{tpu_custom_call.1} parent=1 // pred_check
      _
    $region3: #{tpu_custom_call.1} parent=1 // pred_check_branch
      %11 = sbr.rel (0) target = $region5
    $region4: #{tpu_custom_call.1} parent=1 // pred_region
      %s13 = ssub.s32 256, 256
      %14 = vsyncadd [#allocation3], %s13
      %s15 = sshll.u32 [#allocation2], 4
      %s16 = int_to_ptr.vmem [resolvable:$true] %s15
      %21 = dma.hbm_to_vmem [thread:$0]  %s0, 256, %s16, [#allocation3], 128, 128, 8
    $region5: #{tpu_custom_call.1} parent=1 // pred_fallthru
      _
    // Predicated region
    $region6: #{tpu_custom_call.1} parent=1 // pred_check
      _
    $region7: #{tpu_custom_call.1} parent=1 // pred_check_branch
      %23 = sbr.rel (0) target = $region9
    $region8: #{tpu_custom_call.1} parent=1 // pred_region
      %s25 = ssub.s32 3840, 3840
      %26 = vsyncadd [#allocation6], %s25
      %s27 = sshll.u32 [#allocation5], 4
      %s28 = int_to_ptr.vmem [resolvable:$true] %s27
      %33 = dma.hbm_to_vmem [thread:$0]  %s1, 3840, %s28, [#allocation6], 256, 256, 16
    $region9: #{tpu_custom_call.1} parent=1 // pred_fallthru
      _
    // Predicated region
    $region10: #{tpu_custom_call.1} parent=1 // pred_check
      _
    $region11: #{tpu_custom_call.1} parent=1 // pred_check_branch
      %35 = sbr.rel (0) target = $region13
    $region12: #{tpu_custom_call.1} parent=1 // pred_region
      %36 = dma.done [#allocation3], 256
    $region13: #{tpu_custom_call.1} parent=1 // pred_fallthru
      _
    // Predicated region
    $region14: #{tpu_custom_call.1} parent=1 // pred_check
      _
    $region15: #{tpu_custom_call.1} parent=1 // pred_check_branch
      %38 = sbr.rel (0) target = $region17
    $region16: #{tpu_custom_call.1} parent=1 // pred_region
      %39 = dma.done [#allocation6], 3840
    $region17: #{tpu_custom_call.1} parent=1 // pred_fallthru
      _
    %v40 = vld [vmem:[#allocation2] sm:$0xff]
    %v41 = vld [vmem:[#allocation2 + $0x8] sm:$0xff]
    %v42 = vld [vmem:[#allocation5] sm:$0xff]
    %v43 = vld [vmem:[#allocation5 + $0x8] sm:$0xff]
    %v44 = vld [vmem:[#allocation5 + $0x10] sm:$0xff]
    %v45 = vld [vmem:[#allocation5 + $0x18] sm:$0xff]
    %v46 = vld [vmem:[#allocation5 + $0x20] sm:$0xff]
    %v47 = vld [vmem:[#allocation5 + $0x28] sm:$0xff]
    %v48 = vld [vmem:[#allocation5 + $0x30] sm:$0xff]
    %v49 = vld [vmem:[#allocation5 + $0x38] sm:$0xff]
    %s50 = scalar_lea.vmem [#allocation5], 128
    %v51 = vld [vmem:[%s50] ss:$8 sm:$0x3]
    %v53 = vlaneseq
    %v54 = vshrl.u32 %v53, 7
    %v55 = vsub.s32 0, %v54
    %v56 = vrot.slane %v51, %v55
    %v57 = vlaneseq
    %v58 = vshrl.u32 %v57, 7
    %v59 = vsub.s32 1, %v58
    %v60 = vrot.slane %v51, %v59
    %vm63 = vcmask 261120
    %v65 = vsel %vm63, %v40, 0
    %v68 = vsel %vm63, %v41, 0
    %70 = vmatprep.subr.mxu0 %v43
    %71 = vmatpush1.msra.mxu0 %v42
    %72 = vmatprep.subr.mxu0 %v45
    %73 = vmatpush1.msra.mxu0 %v44
    %74 = vmatprep.subr.mxu0 %v47
    %75 = vmatpush1.msra.mxu0 %v46
    %76 = vmatprep.subr.mxu0 %v49
    %77 = vmatpush1.msra.mxu0 %v48
    %78 = vmatprep.subr.mxu0 0.0
    %79 = vmatpush1.msra.mxu0 0.0
    %80 = vmatprep.subr.mxu0 0.0
    %81 = vmatpush1.msra.mxu0 0.0
    %82 = vmatprep.subr.mxu0 0.0
    %83 = vmatpush1.msra.mxu0 0.0
    %84 = vmatprep.subr.mxu0 0.0
    %85 = vmatpush1.msra.mxu0 0.0
    %86 = vmatprep.subr.mxu0 0.0
    %87 = vmatpush1.msra.mxu0 0.0
    %88 = vmatprep.subr.mxu0 0.0
    %89 = vmatpush1.msra.mxu0 0.0
    %90 = vmatprep.subr.mxu0 0.0
    %91 = vmatpush1.msra.mxu0 0.0
    %92 = vmatprep.subr.mxu0 0.0
    %93 = vmatpush1.msra.mxu0 0.0
    %94 = vmatprep.subr.mxu0 0.0
    %95 = vmatpush1.msra.mxu0 0.0
    %96 = vmatprep.subr.mxu0 0.0
    %97 = vmatpush1.msra.mxu0 0.0
    %98 = vmatprep.subr.mxu0 0.0
    %99 = vmatpush1.msra.mxu0 0.0
    %100 = vmatprep.subr.mxu0 0.0
    %101 = vmatpush1.msra.mxu0 0.0
    %102 = vmatprep.subr.mxu0 0.0
    %103 = vmatpush1.msra.mxu0 0.0
    %104 = vmatprep.subr.mxu0 0.0
    %105 = vmatpush1.msra.mxu0 0.0
    %106 = vmatprep.subr.mxu0 0.0
    %107 = vmatpush1.msra.mxu0 0.0
    %108 = vmatprep.subr.mxu0 0.0
    %109 = vmatpush1.msra.mxu0 0.0
    %110 = vmatprep.subr.mxu0 0.0
    %111 = vmatpush1.msra.mxu0 0.0
    %112 = vmatprep.subr.mxu0 0.0
    %113 = vmatpush1.msra.mxu0 0.0
    %114 = vmatprep.subr.mxu0 0.0
    %115 = vmatpush1.msra.mxu0 0.0
    %116 = vmatprep.subr.mxu0 0.0
    %117 = vmatpush1.msra.mxu0 0.0
    %118 = vmatprep.subr.mxu0 0.0
    %119 = vmatpush1.msra.mxu0 0.0
    %120 = vmatprep.subr.mxu0 0.0
    %121 = vmatpush1.msra.mxu0 0.0
    %122 = vmatprep.subr.mxu0 0.0
    %123 = vmatpush1.msra.mxu0 0.0
    %124 = vmatprep.subr.mxu0 0.0
    %125 = vmatpush1.msra.mxu0 0.0
    %126 = vmatprep.subr.mxu0 0.0
    %127 = vmatpush1.msra.mxu0 0.0
    %128 = vmatprep.subr.mxu0 0.0
    %129 = vmatpush1.msra.mxu0 0.0
    %130 = vmatprep.subr.mxu0 0.0
    %131 = vmatpush1.msra.mxu0 0.0
    %132 = vmatprep.subr.mxu0 0.0
    %133 = vmatpush1.msra.mxu0 0.0
    %134 = vmatprep.mubr.f32.mxu0 0.0
    %135 = vmatmul.mubr.f32.gmra.mrb[0].mxu0 %v65
    %v136 = vpop.f32.mrb[0].mxu0
    %v137 = vadd.f32 %v56, %v136
    %v138 = vpop.f32.mrb[0].mxu0
    %v139 = vadd.f32 %v60, %v138
    %140 = vmatprep.mubr.f32.mxu0 0.0
    %141 = vmatmul.mubr.f32.gmra.mrb[0].mxu0 %v68
    %v142 = vpop.f32.mrb[0].mxu0
    %v143 = vadd.f32 %v56, %v142
    %v144 = vpop.f32.mrb[0].mxu0
    %v145 = vadd.f32 %v60, %v144
    %146 = vdwg.mxu0
    %v147 = vmul.f32 %v137, 0.5
    %v148 = vmul.f32 %v143, 0.5
    %v149 = vmul.f32 %v137, 0.044715
    %v150 = vmul.f32 %v143, 0.044715
    %v151 = vmul.f32 %v149, %v137
    %v152 = vmul.f32 %v150, %v143
    %v153 = vmul.f32 %v151, %v137
    %v154 = vmul.f32 %v152, %v143
    %v155 = vadd.f32 %v137, %v153
    %v156 = vadd.f32 %v143, %v154
    %v157 = vmul.f32 %v155, 0.7978846
    %v158 = vmul.f32 %v156, 0.7978846
    %v159 = vtanh.pop %v157
    %v160 = vtanh.pop %v158
    %v161 = vadd.f32 %v159, 1.0
    %v162 = vadd.f32 %v160, 1.0
    %v163 = vmul.f32 %v147, %v161
    %v164 = vmul.f32 %v148, %v162
    %v165 = vmul.f32 %v139, 0.5
    %v166 = vmul.f32 %v145, 0.5
    %v167 = vtanh.pop %v165
    %v168 = vtanh.pop %v166
    %v169 = vadd.f32 %v167, 1.0
    %v170 = vadd.f32 %v168, 1.0
    %v171 = vmul.f32 %v169, 0.5
    %v172 = vmul.f32 %v170, 0.5
    %v173 = vsub.f32 %v163, %v40
    %v174 = vsub.f32 %v164, %v41
    %v175 = vmul.f32 %v171, %v173
    %v176 = vmul.f32 %v172, %v174
    %v177 = vadd.f32 %v40, %v175
    %v178 = vadd.f32 %v41, %v176
    %v179 = vld [vmem:[#allocation5 + $0x40] sm:$0xff]
    %v180 = vld [vmem:[#allocation5 + $0x48] sm:$0xff]
    %v181 = vld [vmem:[#allocation5 + $0x50] sm:$0xff]
    %v182 = vld [vmem:[#allocation5 + $0x58] sm:$0xff]
    %v183 = vld [vmem:[#allocation5 + $0x60] sm:$0xff]
    %v184 = vld [vmem:[#allocation5 + $0x68] sm:$0xff]
    %v185 = vld [vmem:[#allocation5 + $0x70] sm:$0xff]
    %v186 = vld [vmem:[#allocation5 + $0x78] sm:$0xff]
    %s187 = scalar_lea.vmem [#allocation5], 144
    %v188 = vld [vmem:[%s187] ss:$8 sm:$0x3]
    %v190 = vlaneseq
    %v191 = vshrl.u32 %v190, 7
    %v192 = vsub.s32 0, %v191
    %v193 = vrot.slane %v188, %v192
    %v194 = vlaneseq
    %v195 = vshrl.u32 %v194, 7
    %v196 = vsub.s32 1, %v195
    %v197 = vrot.slane %v188, %v196
    %v201 = vsel %vm63, %v177, 0
    %v204 = vsel %vm63, %v178, 0
    %206 = vmatprep.subr.mxu0 %v180
    %207 = vmatpush1.msra.mxu0 %v179
    %208 = vmatprep.subr.mxu0 %v182
    %209 = vmatpush1.msra.mxu0 %v181
    %210 = vmatprep.subr.mxu0 %v184
    %211 = vmatpush1.msra.mxu0 %v183
    %212 = vmatprep.subr.mxu0 %v186
    %213 = vmatpush1.msra.mxu0 %v185
    %214 = vmatprep.subr.mxu0 0.0
    %215 = vmatpush1.msra.mxu0 0.0
    %216 = vmatprep.subr.mxu0 0.0
    %217 = vmatpush1.msra.mxu0 0.0
    %218 = vmatprep.subr.mxu0 0.0
    %219 = vmatpush1.msra.mxu0 0.0
    %220 = vmatprep.subr.mxu0 0.0
    %221 = vmatpush1.msra.mxu0 0.0
    %222 = vmatprep.subr.mxu0 0.0
    %223 = vmatpush1.msra.mxu0 0.0
    %224 = vmatprep.subr.mxu0 0.0
    %225 = vmatpush1.msra.mxu0 0.0
    %226 = vmatprep.subr.mxu0 0.0
    %227 = vmatpush1.msra.mxu0 0.0
    %228 = vmatprep.subr.mxu0 0.0
    %229 = vmatpush1.msra.mxu0 0.0
    %230 = vmatprep.subr.mxu0 0.0
    %231 = vmatpush1.msra.mxu0 0.0
    %232 = vmatprep.subr.mxu0 0.0
    %233 = vmatpush1.msra.mxu0 0.0
    %234 = vmatprep.subr.mxu0 0.0
    %235 = vmatpush1.msra.mxu0 0.0
    %236 = vmatprep.subr.mxu0 0.0
    %237 = vmatpush1.msra.mxu0 0.0
    %238 = vmatprep.subr.mxu0 0.0
    %239 = vmatpush1.msra.mxu0 0.0
    %240 = vmatprep.subr.mxu0 0.0
    %241 = vmatpush1.msra.mxu0 0.0
    %242 = vmatprep.subr.mxu0 0.0
    %243 = vmatpush1.msra.mxu0 0.0
    %244 = vmatprep.subr.mxu0 0.0
    %245 = vmatpush1.msra.mxu0 0.0
    %246 = vmatprep.subr.mxu0 0.0
    %247 = vmatpush1.msra.mxu0 0.0
    %248 = vmatprep.subr.mxu0 0.0
    %249 = vmatpush1.msra.mxu0 0.0
    %250 = vmatprep.subr.mxu0 0.0
    %251 = vmatpush1.msra.mxu0 0.0
    %252 = vmatprep.subr.mxu0 0.0
    %253 = vmatpush1.msra.mxu0 0.0
    %254 = vmatprep.subr.mxu0 0.0
    %255 = vmatpush1.msra.mxu0 0.0
    %256 = vmatprep.subr.mxu0 0.0
    %257 = vmatpush1.msra.mxu0 0.0
    %258 = vmatprep.subr.mxu0 0.0
    %259 = vmatpush1.msra.mxu0 0.0
    %260 = vmatprep.subr.mxu0 0.0
    %261 = vmatpush1.msra.mxu0 0.0
    %262 = vmatprep.subr.mxu0 0.0
    %263 = vmatpush1.msra.mxu0 0.0
    %264 = vmatprep.subr.mxu0 0.0
    %265 = vmatpush1.msra.mxu0 0.0
    %266 = vmatprep.subr.mxu0 0.0
    %267 = vmatpush1.msra.mxu0 0.0
    %268 = vmatprep.subr.mxu0 0.0
    %269 = vmatpush1.msra.mxu0 0.0
    %270 = vmatprep.mubr.f32.mxu0 0.0
    %271 = vmatmul.mubr.f32.gmra.mrb[0].mxu0 %v201
    %v272 = vpop.f32.mrb[0].mxu0
    %v273 = vadd.f32 %v193, %v272
    %v274 = vpop.f32.mrb[0].mxu0
    %v275 = vadd.f32 %v197, %v274
    %276 = vmatprep.mubr.f32.mxu0 0.0
    %277 = vmatmul.mubr.f32.gmra.mrb[0].mxu0 %v204
    %v278 = vpop.f32.mrb[0].mxu0
    %v279 = vadd.f32 %v193, %v278
    %v280 = vpop.f32.mrb[0].mxu0
    %v281 = vadd.f32 %v197, %v280
    %282 = vdwg.mxu0
    %v283 = vmul.f32 %v273, 0.5
    %v284 = vmul.f32 %v279, 0.5
    %v285 = vmul.f32 %v273, 0.044715
    %v286 = vmul.f32 %v279, 0.044715
    %v287 = vmul.f32 %v285, %v273
    %v288 = vmul.f32 %v286, %v279
    %v289 = vmul.f32 %v287, %v273
    %v290 = vmul.f32 %v288, %v279
    %v291 = vadd.f32 %v273, %v289
    %v292 = vadd.f32 %v279, %v290
    %v293 = vmul.f32 %v291, 0.7978846
    %v294 = vmul.f32 %v292, 0.7978846
    %v295 = vtanh.pop %v293
    %v296 = vtanh.pop %v294
    %v297 = vadd.f32 %v295, 1.0
    %v298 = vadd.f32 %v296, 1.0
    %v299 = vmul.f32 %v283, %v297
    %v300 = vmul.f32 %v284, %v298
    %v301 = vmul.f32 %v275, 0.5
    %v302 = vmul.f32 %v281, 0.5
    %v303 = vtanh.pop %v301
    %v304 = vtanh.pop %v302
    %v305 = vadd.f32 %v303, 1.0
    %v306 = vadd.f32 %v304, 1.0
    %v307 = vmul.f32 %v305, 0.5
    %v308 = vmul.f32 %v306, 0.5
    %v309 = vsub.f32 %v299, %v177
    %v310 = vsub.f32 %v300, %v178
    %v311 = vmul.f32 %v307, %v309
    %v312 = vmul.f32 %v308, %v310
    %v313 = vadd.f32 %v177, %v311
    %v314 = vadd.f32 %v178, %v312
    %v315 = vld [vmem:[#allocation5 + $0xa0] sm:$0xff]
    %v316 = vld [vmem:[#allocation5 + $0xb0] sm:$0xff]
    %v317 = vld [vmem:[#allocation5 + $0xc0] sm:$0xff]
    %v318 = vld [vmem:[#allocation5 + $0xd0] sm:$0xff]
    %v319 = vld [vmem:[#allocation5 + $0xe0] ss:$0 sm:$0xff]
    %v321 = vsel %vm63, %v313, 0
    %v324 = vsel %vm63, %v314, 0
    %326 = vmatprep.subr.mxu0 0.0
    %327 = vmatpush1.msra.mxu0 %v315
    %328 = vmatprep.subr.mxu0 0.0
    %329 = vmatpush1.msra.mxu0 %v316
    %330 = vmatprep.subr.mxu0 0.0
    %331 = vmatpush1.msra.mxu0 %v317
    %332 = vmatprep.subr.mxu0 0.0
    %333 = vmatpush1.msra.mxu0 %v318
    %334 = vmatprep.subr.mxu0 0.0
    %335 = vmatpush1.msra.mxu0 0.0
    %336 = vmatprep.subr.mxu0 0.0
    %337 = vmatpush1.msra.mxu0 0.0
    %338 = vmatprep.subr.mxu0 0.0
    %339 = vmatpush1.msra.mxu0 0.0
    %340 = vmatprep.subr.mxu0 0.0
    %341 = vmatpush1.msra.mxu0 0.0
    %342 = vmatprep.subr.mxu0 0.0
    %343 = vmatpush1.msra.mxu0 0.0
    %344 = vmatprep.subr.mxu0 0.0
    %345 = vmatpush1.msra.mxu0 0.0
    %346 = vmatprep.subr.mxu0 0.0
    %347 = vmatpush1.msra.mxu0 0.0
    %348 = vmatprep.subr.mxu0 0.0
    %349 = vmatpush1.msra.mxu0 0.0
    %350 = vmatprep.subr.mxu0 0.0
    %351 = vmatpush1.msra.mxu0 0.0
    %352 = vmatprep.subr.mxu0 0.0
    %353 = vmatpush1.msra.mxu0 0.0
    %354 = vmatprep.subr.mxu0 0.0
    %355 = vmatpush1.msra.mxu0 0.0
    %356 = vmatprep.subr.mxu0 0.0
    %357 = vmatpush1.msra.mxu0 0.0
    %358 = vmatprep.subr.mxu0 0.0
    %359 = vmatpush1.msra.mxu0 0.0
    %360 = vmatprep.subr.mxu0 0.0
    %361 = vmatpush1.msra.mxu0 0.0
    %362 = vmatprep.subr.mxu0 0.0
    %363 = vmatpush1.msra.mxu0 0.0
    %364 = vmatprep.subr.mxu0 0.0
    %365 = vmatpush1.msra.mxu0 0.0
    %366 = vmatprep.subr.mxu0 0.0
    %367 = vmatpush1.msra.mxu0 0.0
    %368 = vmatprep.subr.mxu0 0.0
    %369 = vmatpush1.msra.mxu0 0.0
    %370 = vmatprep.subr.mxu0 0.0
    %371 = vmatpush1.msra.mxu0 0.0
    %372 = vmatprep.subr.mxu0 0.0
    %373 = vmatpush1.msra.mxu0 0.0
    %374 = vmatprep.subr.mxu0 0.0
    %375 = vmatpush1.msra.mxu0 0.0
    %376 = vmatprep.subr.mxu0 0.0
    %377 = vmatpush1.msra.mxu0 0.0
    %378 = vmatprep.subr.mxu0 0.0
    %379 = vmatpush1.msra.mxu0 0.0
    %380 = vmatprep.subr.mxu0 0.0
    %381 = vmatpush1.msra.mxu0 0.0
    %382 = vmatprep.subr.mxu0 0.0
    %383 = vmatpush1.msra.mxu0 0.0
    %384 = vmatprep.subr.mxu0 0.0
    %385 = vmatpush1.msra.mxu0 0.0
    %386 = vmatprep.subr.mxu0 0.0
    %387 = vmatpush1.msra.mxu0 0.0
    %388 = vmatprep.subr.mxu0 0.0
    %389 = vmatpush1.msra.mxu0 0.0
    %390 = vmatprep.mubr.f32.mxu0 0.0
    %391 = vmatmul.mubr.f32.gmra.mrb[0].mxu0 %v321
    %v392 = vpop.f32.mrb[0].mxu0
    %v393 = vadd.f32 %v319, %v392
    %v394 = vpop.f32.mrb[0].mxu0
    %395 = vmatprep.mubr.f32.mxu0 0.0
    %396 = vmatmul.mubr.f32.gmra.mrb[0].mxu0 %v324
    %v397 = vpop.f32.mrb[0].mxu0
    %v398 = vadd.f32 %v319, %v397
    %v399 = vpop.f32.mrb[0].mxu0
    %400 = vdwg.mxu0
    %401 = vst [vmem:[#allocation7] sm:$0xff] %v393
    %402 = vst [vmem:[#allocation7 + $0x8] sm:$0xff] %v398
    // Predicated region
    $region18: #{tpu_custom_call.1} parent=1 // pred_check
      _
    $region19: #{tpu_custom_call.1} parent=1 // pred_check_branch
      %404 = sbr.rel (0) target = $region21
    $region20: #{tpu_custom_call.1} parent=1 // pred_region
      %s406 = ssub.s32 256, 256
      %407 = vsyncadd [#allocation4], %s406
      %s408 = sshll.u32 [#allocation7], 4
      %s409 = int_to_ptr.vmem [resolvable:$true] %s408
      %414 = dma.vmem_to_hbm [thread:$0]  %s409, 256, %s2, [#allocation4], 128, 128, 8
    $region21: #{tpu_custom_call.1} parent=1 // pred_fallthru
      _
    // Predicated region
    $region22: #{tpu_custom_call.1} parent=1 // pred_check
      _
    $region23: #{tpu_custom_call.1} parent=1 // pred_check_branch
      %416 = sbr.rel (0) target = $region25
    $region24: #{tpu_custom_call.1} parent=1 // pred_region
      %417 = dma.done [#allocation4], 256
    $region25: #{tpu_custom_call.1} parent=1 // pred_fallthru
      _
    %418 = vsyncpa [#allocation3], 1
    %419 = vsyncpa [#allocation6], 1
    %420 = vsyncpa [#allocation4], 1

</llo_original>
